<compile_context>
chip_gen: v7x
topology: tpu7x:2x2x1
jax: 0.10.0
libtpu: 0.0.40
codegen_flags: <defaults>
</compile_context>

<pallas_src>
import functools

import jax
import jax.numpy as jnp
from jax.experimental import pallas as pl
from jax.experimental.pallas import tpu as pltpu

BN_EPS = 1e-5


def _round_up(v, m):
    return ((v + m - 1) // m) * m


def _pad2(a, rows, cols):
    return jnp.pad(a, ((0, rows - a.shape[0]), (0, cols - a.shape[1])))


# --------------------------------------------------------------------------
# Pass 1: partial BatchNorm statistics.  Output block (2, H_P) is resident
# across the (arbitrary) batch-tile axis and accumulated into.
# --------------------------------------------------------------------------
def stats_kernel(x_ref, w1_ref, b1_ref, stat_ref, *, batch, tile_b):
    i = pl.program_id(0)

    @pl.when(i == 0)
    def _():
        stat_ref[...] = jnp.zeros_like(stat_ref)

    # fc1 + ReLU (bf16 MXU inputs, f32 accumulation)
    h = jnp.dot(x_ref[...], w1_ref[...], preferred_element_type=jnp.float32)
    h = jnp.maximum(h + b1_ref[...], 0.0)

    # Mask padded batch rows so they don't pollute the statistics.
    row = jax.lax.broadcasted_iota(jnp.int32, (tile_b, 1), 0) + i * tile_b
    h = jnp.where(row < batch, h, 0.0)

    part = jnp.concatenate(
        [jnp.sum(h, axis=0, keepdims=True),          # sum(h)
         jnp.sum(h * h, axis=0, keepdims=True)],     # sum(h^2)
        axis=0)                                      # (2, H_P) f32
    stat_ref[...] += part


# --------------------------------------------------------------------------
# Pass 2: fc1 + ReLU + (BN folded into) fc2.  Fully parallel over batch tiles.
# --------------------------------------------------------------------------
def fwd_kernel(x_ref, w1_ref, b1_ref, w2_ref, b2_ref, out_ref):
    h = jnp.dot(x_ref[...], w1_ref[...], preferred_element_type=jnp.float32)
    h = jnp.maximum(h + b1_ref[...], 0.0)                      # f32
    y = jnp.dot(h.astype(jnp.bfloat16), w2_ref[...],
                preferred_element_type=jnp.float32)
    out_ref[...] = y + b2_ref[...]


def slp_forward(x, params, *, tile_b=None):
    w1, b1, gamma, beta, w2, b2 = params
    B, n_in = x.shape
    n_hidden = w1.shape[1]
    n_out = w2.shape[1]

    # Lane-dense feature padding.
    IN_P = _round_up(n_in, 128)
    H_P = _round_up(n_hidden, 128)
    OUT_P = _round_up(n_out, 128)

    # Batch tiling (multiple of 16 for bf16 sublane packing).
    if tile_b is None:
        tile_b = min(512, _round_up(B, 16))
    tile_b = _round_up(tile_b, 16)
    num_tiles = (B + tile_b - 1) // tile_b
    B_P = num_tiles * tile_b

    # Padded / cast operands (zero padding keeps padded features inert).
    x_p = _pad2(x, B_P, IN_P).astype(jnp.bfloat16)
    w1_p = _pad2(w1, IN_P, H_P).astype(jnp.bfloat16)
    b1_p = _pad2(b1, 1, H_P).astype(jnp.float32)
    gamma_p = _pad2(gamma, 1, H_P).astype(jnp.float32)
    beta_p = _pad2(beta, 1, H_P).astype(jnp.float32)
    w2_p = _pad2(w2, H_P, OUT_P).astype(jnp.float32)
    b2_p = _pad2(b2, 1, OUT_P).astype(jnp.float32)

    # VMEM budget: tile footprint (double-buffered streams + resident weights),
    # clamped to 3/4 of this generation's physical VMEM.
    step_bytes = (2 * tile_b * IN_P * 2        # x tile (bf16), double-buffered
                  + 2 * tile_b * OUT_P * 4     # out tile (f32), double-buffered
                  + IN_P * H_P * 2             # w1 (resident, bf16)
                  + H_P * OUT_P * 2            # w2_eff (resident, bf16)
                  + tile_b * H_P * 4           # h intermediate (f32)
                  + (2 * H_P + OUT_P) * 4)     # biases / stats
    try:
        vmem_cap = pltpu.get_tpu_info().vmem_capacity_bytes
    except Exception:
        vmem_cap = 64 * 1024 * 1024
    vmem_limit = int(min(max(4 * step_bytes, 32 * 1024 * 1024),
                         3 * vmem_cap // 4))

    # ---------------- pass 1: BN statistics ----------------
    stats = pl.pallas_call(
        functools.partial(stats_kernel, batch=B, tile_b=tile_b),
        out_shape=jax.ShapeDtypeStruct((2, H_P), jnp.float32),
        grid=(num_tiles,),
        in_specs=[
            pl.BlockSpec((tile_b, IN_P), lambda i: (i, 0)),   # x tile
            pl.BlockSpec((IN_P, H_P), lambda i: (0, 0)),      # w1 (resident)
            pl.BlockSpec((1, H_P), lambda i: (0, 0)),         # b1 (resident)
        ],
        out_specs=pl.BlockSpec((2, H_P), lambda i: (0, 0)),   # accumulator
        compiler_params=pltpu.CompilerParams(
            dimension_semantics=("arbitrary",),
            vmem_limit_bytes=vmem_limit),
    )(x_p, w1_p, b1_p)

    # ---------------- BN fold (tiny, f32, plain XLA) ----------------
    mean = stats[0:1, :] / B                               # (1, H_P)
    var = stats[1:2, :] / B - mean * mean                  # biased variance
    s = gamma_p * jax.lax.rsqrt(var + BN_EPS)              # (1, H_P)
    w2_eff = (w2_p * s.T).astype(jnp.bfloat16)             # (H_P, OUT_P)
    b_eff = (beta_p - mean * s) @ w2_p + b2_p              # (1, OUT_P) f32

    # ---------------- pass 2: fused fc1 -> ReLU -> (BN-folded) fc2 ----------
    cost = pl.CostEstimate(
        flops=2 * B_P * (IN_P * H_P + H_P * OUT_P),
        transcendentals=0,
        bytes_accessed=(B_P * IN_P * 2 + IN_P * H_P * 2
                        + H_P * OUT_P * 2 + B_P * OUT_P * 4
                        + (H_P + OUT_P) * 4))

    out_p = pl.pallas_call(
        fwd_kernel,
        out_shape=jax.ShapeDtypeStruct((B_P, OUT_P), jnp.float32),
        grid=(num_tiles,),
        in_specs=[
            pl.BlockSpec((tile_b, IN_P), lambda i: (i, 0)),   # x tile
            pl.BlockSpec((IN_P, H_P), lambda i: (0, 0)),      # w1 (resident)
            pl.BlockSpec((1, H_P), lambda i: (0, 0)),         # b1 (resident)
            pl.BlockSpec((H_P, OUT_P), lambda i: (0, 0)),     # w2_eff (resident)
            pl.BlockSpec((1, OUT_P), lambda i: (0, 0)),       # b_eff (resident)
        ],
        out_specs=pl.BlockSpec((tile_b, OUT_P), lambda i: (i, 0)),
        compiler_params=pltpu.CompilerParams(
            dimension_semantics=("parallel",),                # both TCs on v7x
            vmem_limit_bytes=vmem_limit),
        cost_estimate=cost,
    )(x_p, w1_p, b1_p, w2_eff, b_eff)

    return out_p[:B, :n_out]


# --------------------------------------------------------------------------
# Init / references
# --------------------------------------------------------------------------
def init_params(key, n_in, n_hidden, n_out):
    # Matches torch.nn.Linear default init: U(-1/sqrt(fan_in), 1/sqrt(fan_in)).
    k1, k2, k3, k4 = jax.random.split(key, 4)
    bnd1 = 1.0 / jnp.sqrt(n_in)
    w1 = jax.random.uniform(k1, (n_in, n_hidden), jnp.float32, -bnd1, bnd1)
    b1 = jax.random.uniform(k2, (1, n_hidden), jnp.float32, -bnd1, bnd1)
    gamma = jnp.ones((1, n_hidden), jnp.float32)
    beta = jnp.zeros((1, n_hidden), jnp.float32)
    bnd2 = 1.0 / jnp.sqrt(n_hidden)
    w2 = jax.random.uniform(k3, (n_hidden, n_out), jnp.float32, -bnd2, bnd2)
    b2 = jax.random.uniform(k4, (1, n_out), jnp.float32, -bnd2, bnd2)
    return (w1, b1, gamma, beta, w2, b2)


def slp_reference(x, params):
    """Exact f32 PyTorch-semantics reference."""
    w1, b1, gamma, beta, w2, b2 = params
    h = jnp.maximum(x @ w1 + b1, 0.0)
    mean = h.mean(axis=0, keepdims=True)
    var = ((h - mean) ** 2).mean(axis=0, keepdims=True)
    h = (h - mean) / jnp.sqrt(var + BN_EPS) * gamma + beta
    return h @ w2 + b2


def slp_reference_bf16(x, params):
    """Reference mirroring the kernel's bf16-input / f32-accumulate precision."""
    w1, b1, gamma, beta, w2, b2 = params
    f32 = jnp.float32
    xb = x.astype(jnp.bfloat16).astype(f32)
    w1b = w1.astype(jnp.bfloat16).astype(f32)
    h = jnp.maximum(xb @ w1b + b1, 0.0)
    mean = jnp.mean(h, axis=0, keepdims=True)
    var = jnp.mean(h * h, axis=0, keepdims=True) - mean * mean
    s = gamma * jax.lax.rsqrt(var + BN_EPS)
    w2_eff = (w2 * s.T).astype(jnp.bfloat16).astype(f32)
    b_eff = (beta - mean * s) @ w2 + b2
    return h.astype(jnp.bfloat16).astype(f32) @ w2_eff + b_eff


if __name__ == "__main__":
    # TODO(synk): the module's .inference() softmax is not part of forward();
    # it is intentionally left out of the kernel.
    B, n_in, n_hidden, n_out = 8, 32, 64, 16
    key = jax.random.PRNGKey(0)
    kx, kp = jax.random.split(key)
    x = jax.random.normal(kx, (B, n_in), jnp.float32)
    params = init_params(kp, n_in, n_hidden, n_out)

    out = jax.block_until_ready(slp_forward(x, params))
    assert out.shape == (B, n_out)

    # Tight check vs a reference that uses the same bf16/f32 precision choices.
    ref_b = slp_reference_bf16(x, params)
    assert jnp.allclose(out, ref_b, atol=2e-3, rtol=2e-3), \
        "mismatch vs bf16-precision reference"

    # Loose check vs the exact f32 PyTorch-semantics reference (bf16 MXU noise).
    ref = slp_reference(x, params)
    assert jnp.allclose(out, ref, atol=1e-1, rtol=1e-1), \
        "mismatch vs f32 reference"

    print("KERNEL_OK")
</pallas_src>

<mosaic_0001>
module attributes {stable_mosaic.version = 11 : i64} {
  func.func @stats_kernel(%arg0: i32, %arg1: memref<16x128xbf16, #tpu.memory_space<vmem>>, %arg2: memref<128x128xbf16, #tpu.memory_space<vmem>>, %arg3: memref<1x128xf32, #tpu.memory_space<vmem>>, %arg4: memref<2x128xf32, #tpu.memory_space<vmem>>) attributes {dimension_semantics = [#tpu.dimension_semantics<arbitrary>], iteration_bounds = array<i64: 1>, scalar_prefetch = 0 : i64, scratch_operands = 0 : i64, tpu.core_type = #tpu.core_type<tc>, window_params = [{transform_indices = @transform_0, window_bounds = array<i64: 16, 128>}, {pipeline_mode = #tpu.pipeline_mode<synchronous>, transform_indices = @transform_1, window_bounds = array<i64: 128, 128>}, {pipeline_mode = #tpu.pipeline_mode<synchronous>, transform_indices = @transform_2, window_bounds = array<i64: 1, 128>}, {pipeline_mode = #tpu.pipeline_mode<synchronous>, transform_indices = @transform_3, window_bounds = array<i64: 2, 128>}]} {
    %c0_i32 = arith.constant 0 : i32
    %0 = arith.cmpi eq, %arg0, %c0_i32 : i32
    %1 = arith.extui %0 : i1 to i32
    %c0_i32_0 = arith.constant 0 : i32
    %2 = arith.cmpi ne, %1, %c0_i32_0 : i32
    scf.if %2 {
      %cst_14 = arith.constant 0.000000e+00 : f32
      %30 = vector.broadcast %cst_14 : f32 to vector<2x128xf32>
      %c0_15 = arith.constant 0 : index
      %c0_16 = arith.constant 0 : index
      %31 = vector.load %arg4[%c0_15, %c0_16] : memref<2x128xf32, #tpu.memory_space<vmem>>, vector<2x128xf32>
      tpu.vector_store %arg4[%c0_15, %c0_16], %30 {strides = array<i32>} : memref<2x128xf32, #tpu.memory_space<vmem>>, vector<2x128xf32>,
    } else {
    }
    %c0 = arith.constant 0 : index
    %c0_1 = arith.constant 0 : index
    %3 = vector.load %arg1[%c0, %c0_1] : memref<16x128xbf16, #tpu.memory_space<vmem>>, vector<16x128xbf16>
    %c0_2 = arith.constant 0 : index
    %c0_3 = arith.constant 0 : index
    %4 = vector.load %arg2[%c0_2, %c0_3] : memref<128x128xbf16, #tpu.memory_space<vmem>>, vector<128x128xbf16>
    %cst = arith.constant dense<0.000000e+00> : vector<16x128xf32>
    %5 = tpu.matmul %3, %4, %cst {dimension_numbers = #tpu.dot_dimension_numbers<[1], [0], [0], [1], [0, 0, 1, 1], [], []>} : vector<16x128xbf16>, vector<128x128xbf16>, vector<16x128xf32> -> vector<16x128xf32>
    %c0_4 = arith.constant 0 : index
    %c0_5 = arith.constant 0 : index
    %6 = vector.load %arg3[%c0_4, %c0_5] : memref<1x128xf32, #tpu.memory_space<vmem>>, vector<1x128xf32>
    %7 = vector.broadcast %6 : vector<1x128xf32> to vector<16x128xf32>
    %8 = arith.addf %5, %7 : vector<16x128xf32>
    %cst_6 = arith.constant 0.000000e+00 : f32
    %9 = vector.broadcast %cst_6 : f32 to vector<16x128xf32>
    %10 = arith.maximumf %8, %9 : vector<16x128xf32>
    %11 = tpu.iota {dimensions = array<i32: 0>} : vector<16x1xi32>
    %c16_i32 = arith.constant 16 : i32
    %12 = arith.muli %arg0, %c16_i32 : i32
    %13 = vector.broadcast %12 : i32 to vector<16x1xi32>
    %14 = arith.addi %11, %13 : vector<16x1xi32>
    %c8_i32 = arith.constant 8 : i32
    %15 = vector.broadcast %c8_i32 : i32 to vector<16x1xi32>
    %16 = arith.cmpi slt, %14, %15 : vector<16x1xi32>
    %cst_7 = arith.constant 0.000000e+00 : f32
    %17 = vector.shape_cast %16 : vector<16x1xi1> to vector<16x1xi1>
    %18 = vector.broadcast %17 : vector<16x1xi1> to vector<16x128xi1>
    %19 = vector.broadcast %cst_7 : f32 to vector<16x128xf32>
    %20 = arith.select %18, %10, %19 : vector<16x128xi1>, vector<16x128xf32>
    %cst_8 = arith.constant dense<0.000000e+00> : vector<128xf32>
    %21 = vector.multi_reduction <add>, %20, %cst_8 [0] : vector<16x128xf32> to vector<128xf32>
    %22 = vector.shape_cast %21 : vector<128xf32> to vector<1x128xf32>
    %23 = arith.mulf %20, %20 : vector<16x128xf32>
    %cst_9 = arith.constant dense<0.000000e+00> : vector<128xf32>
    %24 = vector.multi_reduction <add>, %23, %cst_9 [0] : vector<16x128xf32> to vector<128xf32>
    %25 = vector.shape_cast %24 : vector<128xf32> to vector<1x128xf32>
    %26 = tpu.concatenate %22, %25 in 0 : vector<1x128xf32>, vector<1x128xf32> -> vector<2x128xf32>
    %c0_10 = arith.constant 0 : index
    %c0_11 = arith.constant 0 : index
    %27 = vector.load %arg4[%c0_10, %c0_11] : memref<2x128xf32, #tpu.memory_space<vmem>>, vector<2x128xf32>
    %28 = arith.addf %27, %26 : vector<2x128xf32>
    %c0_12 = arith.constant 0 : index
    %c0_13 = arith.constant 0 : index
    %29 = vector.load %arg4[%c0_12, %c0_13] : memref<2x128xf32, #tpu.memory_space<vmem>>, vector<2x128xf32>
    tpu.vector_store %arg4[%c0_12, %c0_13], %28 {strides = array<i32>} : memref<2x128xf32, #tpu.memory_space<vmem>>, vector<2x128xf32>,
    return
  }
  func.func @transform_0(%arg0: i32) -> (i32, i32) {
    %c0_i32 = arith.constant 0 : i32
    %c0_i32_0 = arith.constant 0 : i32
    return %arg0, %c0_i32 : i32, i32
  }
  func.func @transform_1(%arg0: i32) -> (i32, i32) {
    %c0_i32 = arith.constant 0 : i32
    %c0_i32_0 = arith.constant 0 : i32
    %c0_i32_1 = arith.constant 0 : i32
    return %c0_i32, %c0_i32_0 : i32, i32
  }
  func.func @transform_2(%arg0: i32) -> (i32, i32) {
    %c0_i32 = arith.constant 0 : i32
    %c0_i32_0 = arith.constant 0 : i32
    %c0_i32_1 = arith.constant 0 : i32
    return %c0_i32, %c0_i32_0 : i32, i32
  }
  func.func @transform_3(%arg0: i32) -> (i32, i32) {
    %c0_i32 = arith.constant 0 : i32
    %c0_i32_0 = arith.constant 0 : i32
    %c0_i32_1 = arith.constant 0 : i32
    return %c0_i32, %c0_i32_0 : i32, i32
  }
}

</mosaic_0001>

<llo_original>
// kernel: tpu_custom_call.1
$region0: #{tpu_custom_call.1}
  #allocation0 [shape = 'u32[]', space=smem, size = 0x4, offset = 0x4, fixed_abs, tag = 'smem constant byte address 0x4 - core index']
  #allocation1 [shape = 'u32[144,128]{1,0:T(1,128)}', space=vmem, size = 0x12000, scoped, tag = 'internal scratch']
  %s0 = inlined_call_operand.hbm [shape: bf16[16,128], index: 0, kind: input, shape index: {}]
  %s1 = inlined_call_operand.hbm [shape: bf16[128,128], index: 1, kind: input, shape index: {}]
  %s2 = inlined_call_operand.vmem [shape: f32[1,128], index: 2, kind: input, shape index: {}]
  %s3 = inlined_call_operand.hbm [shape: f32[2,128], index: 3, kind: output, shape index: {}]
  %s4 = sld [smem:[#allocation0]]
  $region34: #{tpu_custom_call.1} parent=0
    _
  %s6 = ssub.s32 1, %s4
  %s7 = scalar_select 0, %s6, %s4
  $region1: #{tpu_custom_call.1} parent=0
    #allocation2 [shape = 'u8[4096]{0}', space=vmem, size = 0x1000, scoped, tag = 'input window, operand 0, single buffered']
    #allocation3 [shape = 's32[1]{0}', space=sflag, size = 0x4, scoped, tag = 'scoped memory for tpu_custom_call.1']
    #allocation4 [shape = 's32[1]{0}', space=sflag, size = 0x4, scoped, tag = 'scoped memory for tpu_custom_call.1']
    #allocation5 [shape = 'u8[32768]{0}', space=vmem, size = 0x8000, scoped, tag = 'input window, operand 1, single buffered']
    #allocation6 [shape = 's32[1]{0}', space=sflag, size = 0x4, scoped, tag = 'scoped memory for tpu_custom_call.1']
    #allocation7 [shape = 'u8[1024]{0}', space=vmem, size = 0x400, scoped, tag = 'output window, operand 0, single buffered']
    %8 = vsyncpa [#allocation3], 0
    %9 = vsyncpa [#allocation6], 0
    %10 = vsyncpa [#allocation4], 0
    // Predicated region
    $region2: #{tpu_custom_call.1} parent=1 // pred_check
      _
    $region3: #{tpu_custom_call.1} parent=1 // pred_check_branch
      %12 = sbr.rel (0) target = $region5
    $region4: #{tpu_custom_call.1} parent=1 // pred_region
      %s14 = ssub.s32 128, 128
      %15 = vsyncadd [#allocation3], %s14
      %s16 = sshll.u32 [#allocation2], 4
      %s17 = int_to_ptr.vmem [resolvable:$true] %s16
      %22 = dma.hbm_to_vmem [thread:$0]  %s0, 128, %s17, [#allocation3], 64, 64, 4
    $region5: #{tpu_custom_call.1} parent=1 // pred_fallthru
      _
    // Predicated region
    $region6: #{tpu_custom_call.1} parent=1 // pred_check
      _
    $region7: #{tpu_custom_call.1} parent=1 // pred_check_branch
      %24 = sbr.rel (0) target = $region9
    $region8: #{tpu_custom_call.1} parent=1 // pred_region
      %s26 = ssub.s32 1024, 1024
      %27 = vsyncadd [#allocation6], %s26
      %s28 = sshll.u32 [#allocation5], 4
      %s29 = int_to_ptr.vmem [resolvable:$true] %s28
      %34 = dma.hbm_to_vmem [thread:$0]  %s1, 1024, %s29, [#allocation6], 64, 64, 4
    $region9: #{tpu_custom_call.1} parent=1 // pred_fallthru
      _
    // Predicated region
    $region10: #{tpu_custom_call.1} parent=1 // pred_check
      _
    $region11: #{tpu_custom_call.1} parent=1 // pred_check_branch
      %36 = sbr.rel (0) target = $region13
    $region12: #{tpu_custom_call.1} parent=1 // pred_region
      _
    $region13: #{tpu_custom_call.1} parent=1 // pred_fallthru
      _
    // Predicated region
    $region14: #{tpu_custom_call.1} parent=1 // pred_check
      _
    $region15: #{tpu_custom_call.1} parent=1 // pred_check_branch
      %38 = sbr.rel (0) target = $region17
    $region16: #{tpu_custom_call.1} parent=1 // pred_region
      %39 = dma.done [#allocation3], 128
    $region17: #{tpu_custom_call.1} parent=1 // pred_fallthru
      _
    // Predicated region
    $region18: #{tpu_custom_call.1} parent=1 // pred_check
      _
    $region19: #{tpu_custom_call.1} parent=1 // pred_check_branch
      %41 = sbr.rel (0) target = $region21
    $region20: #{tpu_custom_call.1} parent=1 // pred_region
      %42 = dma.done [#allocation6], 1024
    $region21: #{tpu_custom_call.1} parent=1 // pred_fallthru
      _
    %p44 = scmp.eq.s32.totalorder 0, 0
    // Predicated region
    $region22: #{tpu_custom_call.1} parent=1 // pred_check
      %p45 = pneg %p44
    $region23: #{tpu_custom_call.1} parent=1 // pred_check_branch
      %47 = sbr.rel (%p45) target = $region25
    $region24: #{tpu_custom_call.1} parent=1 // pred_region
      %48 = vst [vmem:[#allocation7] sm:$0x3] 0.0
    $region25: #{tpu_custom_call.1} parent=1 // pred_fallthru
      _
    %v49 = vld [vmem:[#allocation2] sm:$0xf]
    %v50 = vld [vmem:[#allocation2 + $0x4] sm:$0xf]
    %v51 = vld [vmem:[#allocation5] sm:$0xf]
    %v52 = vld [vmem:[#allocation5 + $0x4] sm:$0xf]
    %v53 = vld [vmem:[#allocation5 + $0x8] sm:$0xf]
    %v54 = vld [vmem:[#allocation5 + $0xc] sm:$0xf]
    %v55 = vld [vmem:[#allocation5 + $0x10] sm:$0xf]
    %v56 = vld [vmem:[#allocation5 + $0x14] sm:$0xf]
    %v57 = vld [vmem:[#allocation5 + $0x18] sm:$0xf]
    %v58 = vld [vmem:[#allocation5 + $0x1c] sm:$0xf]
    %v59 = vld [vmem:[#allocation5 + $0x20] sm:$0xf]
    %v60 = vld [vmem:[#allocation5 + $0x24] sm:$0xf]
    %v61 = vld [vmem:[#allocation5 + $0x28] sm:$0xf]
    %v62 = vld [vmem:[#allocation5 + $0x2c] sm:$0xf]
    %v63 = vld [vmem:[#allocation5 + $0x30] sm:$0xf]
    %v64 = vld [vmem:[#allocation5 + $0x34] sm:$0xf]
    %v65 = vld [vmem:[#allocation5 + $0x38] sm:$0xf]
    %v66 = vld [vmem:[#allocation5 + $0x3c] sm:$0xf]
    %v67 = vld [vmem:[%s2] sm:$0x1]
    %v69 = vlaneseq
    %v70 = vshrl.u32 %v69, 7
    %v71 = vsub.s32 0, %v70
    %v72 = vrot.slane %v67, %v71
    %v76 = vunpack.c.l.b16 %v49
    %v77 = vunpack.c.l.b16 %v50
    %v78 = vpack.c.b16 %v77, %v76
    %v96 = vunpack.c.l.b16 %v51
    %v97 = vunpack.c.l.b16 %v52
    %v98 = vunpack.c.l.b16 %v53
    %v99 = vunpack.c.l.b16 %v54
    %v100 = vunpack.c.l.b16 %v55
    %v101 = vunpack.c.l.b16 %v56
    %v102 = vunpack.c.l.b16 %v57
    %v103 = vunpack.c.l.b16 %v58
    %v104 = vunpack.c.l.b16 %v59
    %v105 = vunpack.c.l.b16 %v60
    %v106 = vunpack.c.l.b16 %v61
    %v107 = vunpack.c.l.b16 %v62
    %v108 = vunpack.c.l.b16 %v63
    %v109 = vunpack.c.l.b16 %v64
    %v110 = vunpack.c.l.b16 %v65
    %v111 = vunpack.c.l.b16 %v66
    %v112 = vpack.c.b16 %v97, %v96
    %v113 = vpack.c.b16 %v99, %v98
    %v114 = vpack.c.b16 %v101, %v100
    %v115 = vpack.c.b16 %v103, %v102
    %v116 = vpack.c.b16 %v105, %v104
    %v117 = vpack.c.b16 %v107, %v106
    %v118 = vpack.c.b16 %v109, %v108
    %v119 = vpack.c.b16 %v111, %v110
    %128 = vmatprep.subr.bf16.mxu0 0
    %129 = vmatpush1.bf16.msra.mxu0 %v112
    %130 = vmatprep.subr.bf16.mxu0 0
    %131 = vmatpush1.bf16.msra.mxu0 %v113
    %132 = vmatprep.subr.bf16.mxu0 0
    %133 = vmatpush1.bf16.msra.mxu0 %v114
    %134 = vmatprep.subr.bf16.mxu0 0
    %135 = vmatpush1.bf16.msra.mxu0 %v115
    %136 = vmatprep.subr.bf16.mxu0 0
    %137 = vmatpush1.bf16.msra.mxu0 %v116
    %138 = vmatprep.subr.bf16.mxu0 0
    %139 = vmatpush1.bf16.msra.mxu0 %v117
    %140 = vmatprep.subr.bf16.mxu0 0
    %141 = vmatpush1.bf16.msra.mxu0 %v118
    %142 = vmatprep.subr.bf16.mxu0 0
    %143 = vmatpush1.bf16.msra.mxu0 %v119
    %144 = vmatprep.subr.bf16.mxu0 0
    %145 = vmatpush1.bf16.msra.mxu0 0
    %146 = vmatprep.subr.bf16.mxu0 0
    %147 = vmatpush1.bf16.msra.mxu0 0
    %148 = vmatprep.subr.bf16.mxu0 0
    %149 = vmatpush1.bf16.msra.mxu0 0
    %150 = vmatprep.subr.bf16.mxu0 0
    %151 = vmatpush1.bf16.msra.mxu0 0
    %152 = vmatprep.subr.bf16.mxu0 0
    %153 = vmatpush1.bf16.msra.mxu0 0
    %154 = vmatprep.subr.bf16.mxu0 0
    %155 = vmatpush1.bf16.msra.mxu0 0
    %156 = vmatprep.subr.bf16.mxu0 0
    %157 = vmatpush1.bf16.msra.mxu0 0
    %158 = vmatprep.subr.bf16.mxu0 0
    %159 = vmatpush1.bf16.msra.mxu0 0
    %160 = vmatprep.mubr.bf16.mxu0 0
    %161 = vmatmul.mubr.bf16.gmra.mrb[0].mxu0 %v78
    %v162 = vpop.f32.mrb[0].mxu0
    %v163 = vadd.f32 %v72, %v162
    %v164 = vpop.f32.mrb[0].mxu0
    %v165 = vpop.f32.mrb[0].mxu0
    %v166 = vadd.f32 %v72, %v165
    %v167 = vpop.f32.mrb[0].mxu0
    %168 = vdwg.mxu0
    %v169 = vmax.f32 %v163, 0.0
    %v170 = vmax.f32 %v166, 0.0
    %v171 = vlaneseq
    %v172 = vshrl.u32 %v171, 7
    %v173 = vadd.s32 %v172, 8
    %s174 = smul.u32 0, 16
    %v175 = vstv %s174
    %v176 = vadd.s32 %v172, %v175
    %v177 = vadd.s32 %v173, %v175
    %vm178 = vcmp.lt.s32.totalorder %v176, 8
    %vm179 = vcmp.lt.s32.totalorder %v177, 8
    %v180 = vsel %vm178, 1, 0
    %v181 = vsel %vm179, 1, 0
    %vm182 = vcmp.eq.s32.totalorder %v180, 1
    %vm183 = vcmp.eq.s32.totalorder %v181, 1
    %v184 = vsel %vm182, %v169, 0.0
    %v185 = vsel %vm183, %v170, 0.0
    %v186 = vadd.f32 %v184, %v185
    %v187 = vrot.slane %v186, 4
    %v188 = vadd.f32 %v186, %v187
    %v189 = vrot.slane %v188, 2
    %v190 = vadd.f32 %v188, %v189
    %v191 = vrot.slane %v190, 1
    %v192 = vadd.f32 %v190, %v191
    %v193 = vmul.f32 %v184, %v184
    %v194 = vmul.f32 %v185, %v185
    %v195 = vadd.f32 %v193, %v194
    %v196 = vrot.slane %v195, 4
    %v197 = vadd.f32 %v195, %v196
    %v198 = vrot.slane %v197, 2
    %v199 = vadd.f32 %v197, %v198
    %v200 = vrot.slane %v199, 1
    %v201 = vadd.f32 %v199, %v200
    %vm202 = vcmask 1040384
    %v203 = vsel %vm202, %v192, %v201
    %v204 = vld [vmem:[#allocation7] sm:$0x3]
    %v205 = vadd.f32 %v204, %v203
    %206 = vst [vmem:[#allocation7] sm:$0x3] %v205
    // Predicated region
    $region26: #{tpu_custom_call.1} parent=1 // pred_check
      _
    $region27: #{tpu_custom_call.1} parent=1 // pred_check_branch
      %208 = sbr.rel (0) target = $region29
    $region28: #{tpu_custom_call.1} parent=1 // pred_region
      %s210 = ssub.s32 32, 32
      %211 = vsyncadd [#allocation4], %s210
      %s213 = sshll.u32 [#allocation7], 4
      %s214 = int_to_ptr.vmem [resolvable:$true] %s213
      %216 = dma.vmem_to_hbm [thread:$0]  %s214, 32, %s3, [#allocation4]
    $region29: #{tpu_custom_call.1} parent=1 // pred_fallthru
      _
    // Predicated region
    $region30: #{tpu_custom_call.1} parent=1 // pred_check
      _
    $region31: #{tpu_custom_call.1} parent=1 // pred_check_branch
      %218 = sbr.rel (0) target = $region33
    $region32: #{tpu_custom_call.1} parent=1 // pred_region
      %219 = dma.done [#allocation4], 32
    $region33: #{tpu_custom_call.1} parent=1 // pred_fallthru
      _
    %220 = vsyncpa [#allocation3], 1
    %221 = vsyncpa [#allocation6], 1
    %222 = vsyncpa [#allocation4], 1

</llo_original>
